<compile_context>
chip_gen: v5e
topology: v5e:2x2
jax: 0.10.0
libtpu: 0.0.40
codegen_flags: <defaults>
</compile_context>

<pallas_src>
import jax
import jax.numpy as jnp
from jax.experimental import pallas as pl
from jax.experimental.pallas import tpu as pltpu


def _cdiv(a, b):
    return (a + b - 1) // b


def _tile_plan(B, T, D, itemsize):
    """Pick (block_batch, block_t, vmem_limit_bytes), TPU-generation aware."""
    try:
        phys_vmem = pltpu.get_tpu_info().vmem_capacity_bytes
    except Exception:  # pragma: no cover - conservative fallback
        phys_vmem = 64 << 20
    big_vmem = phys_vmem >= (100 << 20)          # v5e / v6e (128 MiB) vs v7x (64 MiB)
    vmem_limit = (96 << 20) if big_vmem else (40 << 20)
    budget = (28 << 20) if big_vmem else (12 << 20)

    # Cost per (b, t) position inside the kernel:
    #   2 * itemsize : double-buffered native-dtype input DMA buffers
    #   4            : f32 working copy of x for the score reduce
    #   48           : f32 scores/p + the (BB,1,TT) MXU operand (8x sublane padding)
    pos_cost = D * (2 * itemsize + 4) + 48

    if 8 * T * pos_cost <= budget:
        tt = T
        bb_budget = max(8, min(512, (budget // (T * pos_cost)) // 8 * 8))
    else:
        # A single minimal (8, T, D) tile would not fit: split T (online softmax).
        bb_budget = 8
        tt_fit = max(8, (budget // (8 * pos_cost)) // 8 * 8)
        start = max(8, min(tt_fit, (T // 8) * 8))
        tt = 0
        for cand in range(start, 7, -8):       # prefer tt that divides T (no masking)
            if T % cand == 0:
                tt = cand
                break
        if tt == 0:
            tt = start                          # tail T block handled by in-kernel mask
    tt = min(tt, T)

    if B <= 8:
        bb = B                                  # block == full batch dim (no padding)
    else:
        bb = min(bb_budget, (B // 8) * 8)
        # v7x has 2 TensorCores sharing HBM: keep >= 2 (prefer >= 4) batch steps.
        while bb > 8 and _cdiv(B, bb) < 2:
            bb = max(8, (bb // 2) // 8 * 8)
        if bb > 8 and _cdiv(B, bb) < 4 and (bb // 2) * tt * pos_cost >= (1 << 20):
            bb = max(8, (bb // 2) // 8 * 8)
    return bb, tt, vmem_limit


def _make_kernel(seq_len, block_t):
    needs_mask = (seq_len % block_t) != 0

    def kernel(x_ref, w_ref, o_ref, m_sc, l_sc, acc_sc):
        # x_ref: (BB, TT, D) native dtype;  w_ref: (1, D) f32;  o_ref: (BB, D)
        # m_sc/l_sc: (BB, 1) f32;  acc_sc: (BB, D) f32
        t_step = pl.program_id(1)

        @pl.when(t_step == 0)
        def _init():
            m_sc[...] = jnp.full(m_sc.shape, -jnp.inf, m_sc.dtype)
            l_sc[...] = jnp.zeros(l_sc.shape, l_sc.dtype)
            acc_sc[...] = jnp.zeros(acc_sc.shape, acc_sc.dtype)

        x = x_ref[...]                                             # (BB, TT, D)
        if needs_mask:
            # Tail T block: zero out-of-range positions so a 0-weight times garbage
            # (possibly inf/NaN) padding cannot poison the weighted sum.
            t_idx = t_step * block_t + jax.lax.broadcasted_iota(
                jnp.int32, (x.shape[0], x.shape[1]), 1)            # (BB, TT)
            valid = t_idx < seq_len
            x = jnp.where(valid[:, :, None], x, jnp.zeros_like(x))

        # Scores (BB, TT), lane-dense, f32. nn.Linear bias is omitted: softmax over
        # T is shift-invariant so the scalar bias cancels exactly.
        w = w_ref[...].reshape(1, 1, x.shape[-1])                  # (1, 1, D) f32
        scores = jnp.sum(x.astype(jnp.float32) * w, axis=-1)       # (BB, TT)
        if needs_mask:
            scores = jnp.where(valid, scores, -jnp.inf)

        # Online (streaming) softmax over the T grid axis.
        m_prev = m_sc[...]
        m_new = jnp.maximum(m_prev, jnp.max(scores, axis=-1, keepdims=True))
        alpha = jnp.exp(m_prev - m_new)                            # (BB, 1)
        p = jnp.exp(scores - m_new)                                # (BB, TT)
        l_sc[...] = alpha * l_sc[...] + jnp.sum(p, axis=-1, keepdims=True)
        m_sc[...] = m_new

        # Weighted sum over this T block on the MXU (batched matvec, f32 accum).
        # Operands stay in the input dtype (bf16 in -> bf16 MXU; f32 stays f32).
        ctx = jnp.einsum(
            "bqt,btd->bqd",
            p.astype(x_ref.dtype)[:, None, :], x,
            preferred_element_type=jnp.float32,
        )[:, 0, :]                                                 # (BB, D) f32
        acc_sc[...] = alpha * acc_sc[...] + ctx

        @pl.when(t_step == pl.num_programs(1) - 1)
        def _finalize():
            l = l_sc[...]
            inv = pl.reciprocal(l, approx=True)                    # EUP seed
            inv = inv * (2.0 - l * inv)                            # one Newton step
            o_ref[...] = (acc_sc[...] * inv).astype(o_ref.dtype)

    return kernel


def self_attention_pooling(x, w, b=None):
    """x: (B, T, D). w: nn.Linear(embed_dim, 1) weight, shape (1, D) or (D,).
    b: accepted for nn.Linear parity but unused (softmax shift-invariance => the
    scalar bias cancels exactly). Returns (B, D) in x.dtype."""
    del b
    B, T, D = x.shape
    w2 = jnp.asarray(w, jnp.float32).reshape(1, D)

    bb, tt, vmem_limit = _tile_plan(B, T, D, x.dtype.itemsize)
    grid = (_cdiv(B, bb), _cdiv(T, tt))

    return pl.pallas_call(
        _make_kernel(T, tt),
        out_shape=jax.ShapeDtypeStruct((B, D), x.dtype),
        grid_spec=pltpu.PrefetchScalarGridSpec(
            num_scalar_prefetch=0,
            grid=grid,
            in_specs=[
                pl.BlockSpec((bb, tt, D), lambda i, j: (i, j, 0)),
                pl.BlockSpec((1, D), lambda i, j: (0, 0)),
            ],
            out_specs=pl.BlockSpec((bb, D), lambda i, j: (i, 0)),
            scratch_shapes=[
                pltpu.VMEM((bb, 1), jnp.float32),   # running max  m
                pltpu.VMEM((bb, 1), jnp.float32),   # running sum  l
                pltpu.VMEM((bb, D), jnp.float32),   # running context acc
            ],
        ),
        compiler_params=pltpu.CompilerParams(
            dimension_semantics=("parallel", "arbitrary"),
            vmem_limit_bytes=vmem_limit,
        ),
    )(x, w2)


def _reference(x, w, b):
    scores = jnp.einsum("btd,d->bt", x, jnp.reshape(w, (-1,))) + jnp.reshape(b, ())
    weights = jax.nn.softmax(scores, axis=1)[..., None]            # (B, T, 1)
    return jnp.sum(x * weights, axis=1)                            # (B, D)


if __name__ == "__main__":
    B, T, D = 2, 8, 32

    key = jax.random.PRNGKey(0)
    kx, kw, kb = jax.random.split(key, 3)

    x = jax.random.normal(kx, (B, T, D), dtype=jnp.float32)
    # nn.Linear(embed_dim, 1)-shaped params: weight (1, D), bias (1,)
    bound = 1.0 / (D ** 0.5)
    w = jax.random.uniform(kw, (1, D), minval=-bound, maxval=bound, dtype=jnp.float32)
    b = jax.random.uniform(kb, (1,), minval=-bound, maxval=bound, dtype=jnp.float32)

    out = jax.block_until_ready(self_attention_pooling(x, w, b))

    ref = _reference(x, w, b)
    assert out.shape == (B, D)
    assert jnp.allclose(out, ref, atol=1e-4, rtol=1e-4)

    print("KERNEL_OK")
</pallas_src>

<mosaic_0001>
module attributes {stable_mosaic.version = 11 : i64} {
  func.func @kernel(%arg0: i32, %arg1: i32, %arg2: memref<2x8x32xf32, #tpu.memory_space<vmem>>, %arg3: memref<1x32xf32, #tpu.memory_space<vmem>>, %arg4: memref<2x32xf32, #tpu.memory_space<vmem>>, %arg5: memref<2x1xf32, #tpu.memory_space<vmem>>, %arg6: memref<2x1xf32, #tpu.memory_space<vmem>>, %arg7: memref<2x32xf32, #tpu.memory_space<vmem>>) attributes {dimension_semantics = [#tpu.dimension_semantics<parallel>, #tpu.dimension_semantics<arbitrary>], iteration_bounds = array<i64: 1, 1>, scalar_prefetch = 0 : i64, scratch_operands = 3 : i64, tpu.core_type = #tpu.core_type<tc>, window_params = [{transform_indices = @transform_0, window_bounds = array<i64: 2, 8, 32>}, {pipeline_mode = #tpu.pipeline_mode<synchronous>, transform_indices = @transform_1, window_bounds = array<i64: 1, 32>}, {transform_indices = @transform_2, window_bounds = array<i64: 2, 32>}]} {
    %c0_i32 = arith.constant 0 : i32
    %0 = arith.cmpi eq, %arg1, %c0_i32 : i32
    %1 = arith.extui %0 : i1 to i32
    %c0_i32_0 = arith.constant 0 : i32
    %2 = arith.cmpi ne, %1, %c0_i32_0 : i32
    scf.if %2 {
      %cst_22 = arith.constant 0xFF800000 : f32
      %36 = vector.broadcast %cst_22 : f32 to vector<2x1xf32>
      %c0_23 = arith.constant 0 : index
      %c0_24 = arith.constant 0 : index
      %37 = vector.load %arg5[%c0_23, %c0_24] : memref<2x1xf32, #tpu.memory_space<vmem>>, vector<2x1xf32>
      tpu.vector_store %arg5[%c0_23, %c0_24], %36 {strides = array<i32>} : memref<2x1xf32, #tpu.memory_space<vmem>>, vector<2x1xf32>,
      %cst_25 = arith.constant 0.000000e+00 : f32
      %38 = vector.broadcast %cst_25 : f32 to vector<2x1xf32>
      %c0_26 = arith.constant 0 : index
      %c0_27 = arith.constant 0 : index
      %39 = vector.load %arg6[%c0_26, %c0_27] : memref<2x1xf32, #tpu.memory_space<vmem>>, vector<2x1xf32>
      tpu.vector_store %arg6[%c0_26, %c0_27], %38 {strides = array<i32>} : memref<2x1xf32, #tpu.memory_space<vmem>>, vector<2x1xf32>,
      %cst_28 = arith.constant 0.000000e+00 : f32
      %40 = vector.broadcast %cst_28 : f32 to vector<2x32xf32>
      %c0_29 = arith.constant 0 : index
      %c0_30 = arith.constant 0 : index
      %41 = vector.load %arg7[%c0_29, %c0_30] : memref<2x32xf32, #tpu.memory_space<vmem>>, vector<2x32xf32>
      tpu.vector_store %arg7[%c0_29, %c0_30], %40 {strides = array<i32>} : memref<2x32xf32, #tpu.memory_space<vmem>>, vector<2x32xf32>,
    } else {
    }
    %c0 = arith.constant 0 : index
    %c0_1 = arith.constant 0 : index
    %c0_2 = arith.constant 0 : index
    %3 = vector.load %arg2[%c0, %c0_1, %c0_2] : memref<2x8x32xf32, #tpu.memory_space<vmem>>, vector<2x8x32xf32>
    %c0_3 = arith.constant 0 : index
    %c0_4 = arith.constant 0 : index
    %4 = vector.load %arg3[%c0_3, %c0_4] : memref<1x32xf32, #tpu.memory_space<vmem>>, vector<1x32xf32>
    %5 = vector.shape_cast %4 : vector<1x32xf32> to vector<1x1x32xf32>
    %6 = vector.broadcast %5 : vector<1x1x32xf32> to vector<2x8x32xf32>
    %7 = arith.mulf %3, %6 : vector<2x8x32xf32>
    %cst = arith.constant dense<0.000000e+00> : vector<2x8xf32>
    %8 = vector.multi_reduction <add>, %7, %cst [2] : vector<2x8x32xf32> to vector<2x8xf32>
    %c0_5 = arith.constant 0 : index
    %c0_6 = arith.constant 0 : index
    %9 = vector.load %arg5[%c0_5, %c0_6] : memref<2x1xf32, #tpu.memory_space<vmem>>, vector<2x1xf32>
    %cst_7 = arith.constant dense<0xFF800000> : vector<2xf32>
    %10 = vector.multi_reduction <maximumf>, %8, %cst_7 [1] : vector<2x8xf32> to vector<2xf32>
    %11 = vector.shape_cast %10 : vector<2xf32> to vector<2x1xf32>
    %12 = arith.maximumf %9, %11 : vector<2x1xf32>
    %13 = arith.subf %9, %12 : vector<2x1xf32>
    %14 = math.exp %13 : vector<2x1xf32>
    %15 = vector.broadcast %12 : vector<2x1xf32> to vector<2x8xf32>
    %16 = arith.subf %8, %15 : vector<2x8xf32>
    %17 = math.exp %16 : vector<2x8xf32>
    %c0_8 = arith.constant 0 : index
    %c0_9 = arith.constant 0 : index
    %18 = vector.load %arg6[%c0_8, %c0_9] : memref<2x1xf32, #tpu.memory_space<vmem>>, vector<2x1xf32>
    %19 = arith.mulf %14, %18 : vector<2x1xf32>
    %cst_10 = arith.constant dense<0.000000e+00> : vector<2xf32>
    %20 = vector.multi_reduction <add>, %17, %cst_10 [1] : vector<2x8xf32> to vector<2xf32>
    %21 = vector.shape_cast %20 : vector<2xf32> to vector<2x1xf32>
    %22 = arith.addf %19, %21 : vector<2x1xf32>
    %c0_11 = arith.constant 0 : index
    %c0_12 = arith.constant 0 : index
    %23 = vector.load %arg6[%c0_11, %c0_12] : memref<2x1xf32, #tpu.memory_space<vmem>>, vector<2x1xf32>
    tpu.vector_store %arg6[%c0_11, %c0_12], %22 {strides = array<i32>} : memref<2x1xf32, #tpu.memory_space<vmem>>, vector<2x1xf32>,
    %c0_13 = arith.constant 0 : index
    %c0_14 = arith.constant 0 : index
    %24 = vector.load %arg5[%c0_13, %c0_14] : memref<2x1xf32, #tpu.memory_space<vmem>>, vector<2x1xf32>
    tpu.vector_store %arg5[%c0_13, %c0_14], %12 {strides = array<i32>} : memref<2x1xf32, #tpu.memory_space<vmem>>, vector<2x1xf32>,
    %25 = vector.shape_cast %17 : vector<2x8xf32> to vector<2x1x8xf32>
    "tpu.trace_start"() <{level = 10 : i32, message = "bqt,btd->bqd"}> : () -> ()
    %cst_15 = arith.constant dense<0.000000e+00> : vector<2x1x32xf32>
    %26 = tpu.matmul %25, %3, %cst_15 {dimension_numbers = #tpu.dot_dimension_numbers<[2], [1], [1], [2], [0, 0, 0, 1, 1, 2], [0], [0]>} : vector<2x1x8xf32>, vector<2x8x32xf32>, vector<2x1x32xf32> -> vector<2x1x32xf32>
    "tpu.trace_stop"() : () -> ()
    %27 = vector.shape_cast %26 : vector<2x1x32xf32> to vector<2x32xf32>
    %c0_16 = arith.constant 0 : index
    %c0_17 = arith.constant 0 : index
    %28 = vector.load %arg7[%c0_16, %c0_17] : memref<2x32xf32, #tpu.memory_space<vmem>>, vector<2x32xf32>
    %29 = vector.broadcast %14 : vector<2x1xf32> to vector<2x32xf32>
    %30 = arith.mulf %29, %28 : vector<2x32xf32>
    %31 = arith.addf %30, %27 : vector<2x32xf32>
    %c0_18 = arith.constant 0 : index
    %c0_19 = arith.constant 0 : index
    %32 = vector.load %arg7[%c0_18, %c0_19] : memref<2x32xf32, #tpu.memory_space<vmem>>, vector<2x32xf32>
    tpu.vector_store %arg7[%c0_18, %c0_19], %31 {strides = array<i32>} : memref<2x32xf32, #tpu.memory_space<vmem>>, vector<2x32xf32>,
    %c0_i32_20 = arith.constant 0 : i32
    %33 = arith.cmpi eq, %arg1, %c0_i32_20 : i32
    %34 = arith.extui %33 : i1 to i32
    %c0_i32_21 = arith.constant 0 : i32
    %35 = arith.cmpi ne, %34, %c0_i32_21 : i32
    scf.if %35 {
      %c0_22 = arith.constant 0 : index
      %c0_23 = arith.constant 0 : index
      %36 = vector.load %arg6[%c0_22, %c0_23] : memref<2x1xf32, #tpu.memory_space<vmem>>, vector<2x1xf32>
      %37 = tpu.reciprocal %36 {approx = true} : vector<2x1xf32> -> vector<2x1xf32>
      %38 = arith.mulf %36, %37 : vector<2x1xf32>
      %cst_24 = arith.constant 2.000000e+00 : f32
      %39 = vector.broadcast %cst_24 : f32 to vector<2x1xf32>
      %40 = arith.subf %39, %38 : vector<2x1xf32>
      %41 = arith.mulf %37, %40 : vector<2x1xf32>
      %c0_25 = arith.constant 0 : index
      %c0_26 = arith.constant 0 : index
      %42 = vector.load %arg7[%c0_25, %c0_26] : memref<2x32xf32, #tpu.memory_space<vmem>>, vector<2x32xf32>
      %43 = vector.broadcast %41 : vector<2x1xf32> to vector<2x32xf32>
      %44 = arith.mulf %42, %43 : vector<2x32xf32>
      %c0_27 = arith.constant 0 : index
      %c0_28 = arith.constant 0 : index
      %45 = vector.load %arg4[%c0_27, %c0_28] : memref<2x32xf32, #tpu.memory_space<vmem>>, vector<2x32xf32>
      tpu.vector_store %arg4[%c0_27, %c0_28], %44 {strides = array<i32>} : memref<2x32xf32, #tpu.memory_space<vmem>>, vector<2x32xf32>,
    } else {
    }
    return
  }
  func.func @transform_0(%arg0: i32, %arg1: i32) -> (i32, i32, i32) {
    %c0_i32 = arith.constant 0 : i32
    %c0_i32_0 = arith.constant 0 : i32
    return %arg0, %arg1, %c0_i32 : i32, i32, i32
  }
  func.func @transform_1(%arg0: i32, %arg1: i32) -> (i32, i32) {
    %c0_i32 = arith.constant 0 : i32
    %c0_i32_0 = arith.constant 0 : i32
    %c0_i32_1 = arith.constant 0 : i32
    return %c0_i32, %c0_i32_0 : i32, i32
  }
  func.func @transform_2(%arg0: i32, %arg1: i32) -> (i32, i32) {
    %c0_i32 = arith.constant 0 : i32
    %c0_i32_0 = arith.constant 0 : i32
    return %arg0, %c0_i32 : i32, i32
  }
}

</mosaic_0001>

<llo_original>
// kernel: tpu_custom_call.1
$region0: #{tpu_custom_call.1}
  #allocation0 [shape = 'u32[]', space=smem, size = 0x4, offset = 0x4, fixed_abs, tag = 'smem constant byte address 0x4 - core index']
  #allocation1 [shape = 'u32[72,128]{1,0:T(1,128)}', space=vmem, size = 0x9000, scoped, tag = 'internal scratch']
  #allocation2 [shape = 'f32[2,1]{1,0:T(2,128)}', space=vmem, size = 0x400, scoped, tag = 'scratch operand']
  #allocation3 [shape = 'f32[2,1]{1,0:T(2,128)}', space=vmem, size = 0x400, scoped, tag = 'scratch operand']
  #allocation4 [shape = 'f32[2,32]{1,0:T(2,128)}', space=vmem, size = 0x400, scoped, tag = 'scratch operand']
  %s0 = inlined_call_operand.hbm [shape: f32[2,8,32], index: 0, kind: input, shape index: {}]
  %s1 = inlined_call_operand.hbm [shape: f32[1,32], index: 1, kind: input, shape index: {}]
  %s2 = inlined_call_operand.hbm [shape: f32[2,32], index: 2, kind: output, shape index: {}]
  %s3 = sld [smem:[#allocation0]]
  $region34: #{tpu_custom_call.1} parent=0
    _
  %s5 = ssub.s32 1, %s3
  %s6 = scalar_select 0, %s5, %s3
  $region1: #{tpu_custom_call.1} parent=0
    #allocation5 [shape = 'u8[8192]{0}', space=vmem, size = 0x2000, scoped, tag = 'input window, operand 0, single buffered']
    #allocation6 [shape = 's32[1]{0}', space=sflag, size = 0x4, scoped, tag = 'scoped memory for tpu_custom_call.1']
    #allocation7 [shape = 's32[1]{0}', space=sflag, size = 0x4, scoped, tag = 'scoped memory for tpu_custom_call.1']
    #allocation8 [shape = 'u8[512]{0}', space=vmem, size = 0x400, scoped, tag = 'input window, operand 1, single buffered']
    #allocation9 [shape = 's32[1]{0}', space=sflag, size = 0x4, scoped, tag = 'scoped memory for tpu_custom_call.1']
    #allocation10 [shape = 'u8[1024]{0}', space=vmem, size = 0x400, scoped, tag = 'output window, operand 0, single buffered']
    %7 = vsyncpa [#allocation6], 0
    %8 = vsyncpa [#allocation9], 0
    %9 = vsyncpa [#allocation7], 0
    // Predicated region
    $region2: #{tpu_custom_call.1} parent=1 // pred_check
      _
    $region3: #{tpu_custom_call.1} parent=1 // pred_check_branch
      %11 = sbr.rel (0) target = $region5
    $region4: #{tpu_custom_call.1} parent=1 // pred_region
      %13 = vsyncadd [#allocation6], 0
      %s14 = sshll.u32 %s0, 4
      %s15 = int_to_ptr.hbm [resolvable:$true] %s14
      %s16 = sshll.u32 [#allocation5], 4
      %s17 = int_to_ptr.vmem [resolvable:$true] %s16
      %22 = dma.hbm_to_vmem [thread:$0]  %s15, 256, %s17, [#allocation6], 128, 128, 8
    $region5: #{tpu_custom_call.1} parent=1 // pred_fallthru
      _
    // Predicated region
    $region6: #{tpu_custom_call.1} parent=1 // pred_check
      _
    $region7: #{tpu_custom_call.1} parent=1 // pred_check_branch
      %24 = sbr.rel (0) target = $region9
    $region8: #{tpu_custom_call.1} parent=1 // pred_region
      %26 = vsyncadd [#allocation9], 0
      %s28 = sshll.u32 %s1, 4
      %s29 = int_to_ptr.hbm [resolvable:$true] %s28
      %s30 = sshll.u32 [#allocation8], 4
      %s31 = int_to_ptr.vmem [resolvable:$true] %s30
      %33 = dma.hbm_to_vmem [thread:$0]  %s29, 16, %s31, [#allocation9]
    $region9: #{tpu_custom_call.1} parent=1 // pred_fallthru
      _
    // Predicated region
    $region10: #{tpu_custom_call.1} parent=1 // pred_check
      _
    $region11: #{tpu_custom_call.1} parent=1 // pred_check_branch
      %35 = sbr.rel (0) target = $region13
    $region12: #{tpu_custom_call.1} parent=1 // pred_region
      %37 = dma.done [#allocation6], 256
    $region13: #{tpu_custom_call.1} parent=1 // pred_fallthru
      _
    // Predicated region
    $region14: #{tpu_custom_call.1} parent=1 // pred_check
      _
    $region15: #{tpu_custom_call.1} parent=1 // pred_check_branch
      %39 = sbr.rel (0) target = $region17
    $region16: #{tpu_custom_call.1} parent=1 // pred_region
      %41 = dma.done [#allocation9], 16
    $region17: #{tpu_custom_call.1} parent=1 // pred_fallthru
      _
    %p42 = scmp.eq.s32.totalorder 0, 0
    // Predicated region
    $region18: #{tpu_custom_call.1} parent=1 // pred_check
      %p43 = pneg %p42
    $region19: #{tpu_custom_call.1} parent=1 // pred_check_branch
      %45 = sbr.rel (%p43) target = $region21
    $region20: #{tpu_custom_call.1} parent=1 // pred_region
      %vm46 = vcmask 1024
      %47 = vst.msk [vmem:[#allocation2] sm:$0x3] %vm46, -inf
      %48 = vst.msk [vmem:[#allocation3] sm:$0x3] %vm46, 0.0
      %vm49 = vcmask 254976
      %50 = vst.msk [vmem:[#allocation4] sm:$0x3] %vm49, 0.0
    $region21: #{tpu_custom_call.1} parent=1 // pred_fallthru
      _
    %v51 = vld [vmem:[#allocation5] sm:$0xff]
    %v52 = vld [vmem:[#allocation5 + $0x8] sm:$0xff]
    %v53 = vld [vmem:[#allocation8] sm:$0x1]
    %v55 = vperm.slane %v53, 0
    %v57 = vmul.f32 %v51, %v55
    %v58 = vmul.f32 %v52, %v55
    %vm59 = vcmask 261120
    %v60 = vsel %vm59, %v57, 0.0
    %61 = vadd.xlane.f32.xlu0 %v60
    %v62 = vpop.xlane.xlu0 %61
    %v63 = vsel %vm59, %v58, 0.0
    %64 = vadd.xlane.f32.xlu0 %v63
    %v65 = vpop.xlane.xlu0 %64
    %v66 = vld [vmem:[#allocation2] sm:$0x3]
    %v69 = vlaneseq
    %v70 = vand.u32 %v69, 127
    %v71 = vperm.slane %v62, %v70
    %v72 = vperm.slane %v65, %v70
    %vm73 = vcmask 1041409
    %v74 = vsel %vm73, %v72, %v71
    %vm76 = vcmask 58368
    %v77 = vsel %vm76, %v74, -inf
    %78 = vmax.xlane.f32.xlu0 %v77
    %v79 = vpop.xlane.xlu0 %78
    %v80 = vmax.f32 %v66, %v79
    %v81 = vsub.f32 %v66, %v80
    %v82 = vmul.f32 %v81, 1.442695
    %v83 = vpow.pop %v82
    %85 = vset.pattern.permute.xlu0 0
    %86 = vperm.xlu0 %85, %v80
    %v87 = vpop.permute.xlu0 %86
    %v88 = vperm.slane %v87, 0
    %v89 = vperm.slane %v87, 1
    %v92 = vsub.f32 %v62, %v88
    %v93 = vsub.f32 %v65, %v89
    %v94 = vmul.f32 %v92, 1.442695
    %v95 = vpow.pop %v94
    %v96 = vmul.f32 %v93, 1.442695
    %v97 = vpow.pop %v96
    %v98 = vld [vmem:[#allocation3] sm:$0x3]
    %v99 = vmul.f32 %v83, %v98
    %102 = vset.pattern.permute.xlu0 0
    %103 = vperm.xlu0 %102, %v95
    %v104 = vpop.permute.xlu0 %103
    %105 = vset.pattern.permute.xlu0 0
    %106 = vperm.xlu0 %105, %v97
    %v107 = vpop.permute.xlu0 %106
    %v108 = vperm.slane %v104, %v70
    %v109 = vperm.slane %v107, %v70
    %v110 = vsel %vm73, %v109, %v108
    %v112 = vsel %vm76, %v110, 0.0
    %113 = vadd.xlane.f32.xlu0 %v112
    %v114 = vpop.xlane.xlu0 %113
    %v115 = vadd.f32 %v99, %v114
    %vm116 = vcmask 1024
    %117 = vst.msk [vmem:[#allocation3] sm:$0x3] %vm116, %v115
    %118 = vst.msk [vmem:[#allocation2] sm:$0x3] %vm116, %v80
    %vm119 = vcmask 64512
    %v120 = vsel %vm119, %v108, 0
    %122 = vmatpush.msra.mxu0 0.0
    %123 = vmatpush.msra.mxu0 0.0
    %124 = vmatpush.msra.mxu0 0.0
    %125 = vmatpush.msra.mxu0 0.0
    %126 = vmatpush.msra.mxu0 0.0
    %127 = vmatpush.msra.mxu0 0.0
    %128 = vmatpush.msra.mxu0 0.0
    %129 = vmatpush.msra.mxu0 0.0
    %130 = vmatpush.msra.mxu0 0.0
    %131 = vmatpush.msra.mxu0 0.0
    %132 = vmatpush.msra.mxu0 0.0
    %133 = vmatpush.msra.mxu0 0.0
    %134 = vmatpush.msra.mxu0 0.0
    %135 = vmatpush.msra.mxu0 0.0
    %136 = vmatpush.msra.mxu0 0.0
    %137 = vmatpush.msra.mxu0 %v51
    %138 = vmatmul.f32.gmra.mxu0 %v120
    %v139 = vpop.f32.mrf.mxu0
    %v140 = vadd.f32 0.0, %v139
    %141 = vdwg.mxu0
    %v142 = vsel %vm119, %v109, 0
    %144 = vmatpush.msra.mxu0 0.0
    %145 = vmatpush.msra.mxu0 0.0
    %146 = vmatpush.msra.mxu0 0.0
    %147 = vmatpush.msra.mxu0 0.0
    %148 = vmatpush.msra.mxu0 0.0
    %149 = vmatpush.msra.mxu0 0.0
    %150 = vmatpush.msra.mxu0 0.0
    %151 = vmatpush.msra.mxu0 0.0
    %152 = vmatpush.msra.mxu0 0.0
    %153 = vmatpush.msra.mxu0 0.0
    %154 = vmatpush.msra.mxu0 0.0
    %155 = vmatpush.msra.mxu0 0.0
    %156 = vmatpush.msra.mxu0 0.0
    %157 = vmatpush.msra.mxu0 0.0
    %158 = vmatpush.msra.mxu0 0.0
    %159 = vmatpush.msra.mxu0 %v52
    %160 = vmatmul.f32.gmra.mxu0 %v142
    %v161 = vpop.f32.mrf.mxu0
    %v162 = vadd.f32 0.0, %v161
    %163 = vdwg.mxu0
    %v164 = vld [vmem:[#allocation4] sm:$0x3]
    %166 = vset.pattern.permute.xlu0 0
    %167 = vperm.xlu0 %166, %v83
    %v168 = vpop.permute.xlu0 %167
    %v170 = vmul.f32 %v168, %v164
    %v173 = vrot.slane %v162, 7
    %v174 = vsel %vm73, %v173, %v140
    %v176 = vadd.f32 %v170, %v174
    %vm177 = vcmask 254976
    %178 = vst.msk [vmem:[#allocation4] sm:$0x3] %vm177, %v176
    // Predicated region
    $region22: #{tpu_custom_call.1} parent=1 // pred_check
      %p179 = pneg %p42
    $region23: #{tpu_custom_call.1} parent=1 // pred_check_branch
      %181 = sbr.rel (%p179) target = $region25
    $region24: #{tpu_custom_call.1} parent=1 // pred_region
      %v182 = vld [vmem:[#allocation3] sm:$0x3]
      %v183 = vrcp.pop %v182
      %v184 = vmul.f32 %v182, %v183
      %v185 = vsub.f32 2.0, %v184
      %v186 = vmul.f32 %v183, %v185
      %v187 = vld [vmem:[#allocation4] sm:$0x3]
      %189 = vset.pattern.permute.xlu0 0
      %190 = vperm.xlu0 %189, %v186
      %v191 = vpop.permute.xlu0 %190
      %v193 = vmul.f32 %v187, %v191
      %194 = vst.msk [vmem:[#allocation10] sm:$0x3] %vm177, %v193
    $region25: #{tpu_custom_call.1} parent=1 // pred_fallthru
      _
    // Predicated region
    $region26: #{tpu_custom_call.1} parent=1 // pred_check
      _
    $region27: #{tpu_custom_call.1} parent=1 // pred_check_branch
      %196 = sbr.rel (0) target = $region29
    $region28: #{tpu_custom_call.1} parent=1 // pred_region
      %198 = vsyncadd [#allocation7], 0
      %s200 = sshll.u32 [#allocation10], 4
      %s201 = int_to_ptr.vmem [resolvable:$true] %s200
      %s202 = sshll.u32 %s2, 4
      %s203 = int_to_ptr.hbm [resolvable:$true] %s202
      %205 = dma.vmem_to_hbm [thread:$0]  %s201, 32, %s203, [#allocation7]
    $region29: #{tpu_custom_call.1} parent=1 // pred_fallthru
      _
    // Predicated region
    $region30: #{tpu_custom_call.1} parent=1 // pred_check
      _
    $region31: #{tpu_custom_call.1} parent=1 // pred_check_branch
      %207 = sbr.rel (0) target = $region33
    $region32: #{tpu_custom_call.1} parent=1 // pred_region
      %209 = dma.done [#allocation7], 32
    $region33: #{tpu_custom_call.1} parent=1 // pred_fallthru
      _
    %210 = vsyncpa [#allocation6], 1
    %211 = vsyncpa [#allocation9], 1
    %212 = vsyncpa [#allocation7], 1

</llo_original>
